<compile_context>
chip_gen: v7x
topology: tpu7x:2x2x1
jax: 0.10.0
libtpu: 0.0.40
codegen_flags: <defaults>
</compile_context>

<pallas_src>
import functools

import jax
import jax.numpy as jnp
from jax import lax
from jax.experimental import pallas as pl
from jax.experimental.pallas import tpu as pltpu

_BIG = float(jnp.finfo(jnp.float32).max)  # pushes same-label entries out of the row min


def _batch_hard_triplet_kernel(
    anchor_ref,   # (TM, D)  anchor embedding tile (matmul dtype)
    embt_ref,     # (D, B)   full embeddings, pre-transposed, resident (matmul dtype)
    sqrow_ref,    # (1, B)   squared norms of all embeddings, f32, resident
    sqcol_ref,    # (TM, 1)  squared norms of the anchor tile, f32
    lab_row_ref,  # (1, B)   labels as a row, int32, resident
    lab_col_ref,  # (TM, 1)  labels of the anchor tile, int32
    out_ref,      # (TM, 1)  per-anchor clamped triplet losses, f32
    *,
    margin,
):
    a = anchor_ref[...]
    et = embt_ref[...]

    # (TM, B) = A @ E^T, fed to the MXU in canonical (M,K)@(K,N) orientation.
    dot = jnp.dot(a, et, preferred_element_type=jnp.float32)

    # Squared pairwise euclidean distances (norms are loop-invariant wrapper inputs).
    dist_sq = jnp.maximum(sqrow_ref[...] - 2.0 * dot + sqcol_ref[...], 0.0)  # (TM, B)

    # labels_equal[i, j] = (labels[anchor_i] == labels[j])
    labels_equal = lab_col_ref[...] == lab_row_ref[...]                      # (TM, B)

    tm, b = dist_sq.shape
    row_ids = lax.broadcasted_iota(jnp.int32, (tm, b), 0) + pl.program_id(0) * tm
    col_ids = lax.broadcasted_iota(jnp.int32, (tm, b), 1)
    pos_mask = labels_equal & (row_ids != col_ids)                           # eye-excluded

    # Batch-hard mining on squared distances (sqrt is monotone, so the arg of the
    # max/min is unchanged); sqrt touches only the reduced (TM, 1) vectors.
    hardest_pos_sq = jnp.max(jnp.where(pos_mask, dist_sq, 0.0), axis=1, keepdims=True)
    hardest_neg_sq = jnp.min(jnp.where(labels_equal, _BIG, dist_sq), axis=1, keepdims=True)

    hardest_positive = jnp.sqrt(hardest_pos_sq)
    hardest_negative = jnp.sqrt(hardest_neg_sq)

    out_ref[...] = jnp.maximum(hardest_positive - hardest_negative + margin, 0.0)


def _pick_block_m(B: int) -> int:
    # Largest MXU/VPU-friendly anchor tile dividing B (256 caps the (TM, B) working
    # set; all candidates are multiples of 16 -> bf16 sublane packing friendly).
    for tm in (256, 128, 64, 32, 16, 8):
        if B % tm == 0:
            return tm
    # Odd batch sizes fall back to a single resident block.
    # TODO(synk): pad B to a multiple of 8 (with masked padded columns) for odd batches.
    return B


def _vmem_limit_bytes() -> int:
    # Generation-aware VMEM limit: physical capacity minus headroom for compiler
    # scratch / semaphores / anchor-tile double buffers (never pin the full 64 MiB
    # on v7x; allow ~100 MiB on v5e/v6e where physical VMEM is 128 MiB).
    try:
        cap = int(pltpu.get_tpu_info().vmem_capacity_bytes)
    except Exception:
        cap = 128 * 1024 * 1024
    return max(32 * 1024 * 1024, min(cap - 16 * 1024 * 1024, 100 * 1024 * 1024))


def _build_call(B, D, tm, margin, single_buffer_resident):
    num_tiles = B // tm
    resident_kw = {}
    if single_buffer_resident and hasattr(pl, "Buffered"):
        # Constant-index blocks never change -> no need for the default double buffer.
        resident_kw = dict(pipeline_mode=pl.Buffered(1))

    kernel = functools.partial(_batch_hard_triplet_kernel, margin=float(margin))

    return pl.pallas_call(
        kernel,
        out_shape=jax.ShapeDtypeStruct((B, 1), jnp.float32),
        grid_spec=pltpu.PrefetchScalarGridSpec(
            num_scalar_prefetch=0,
            grid=(num_tiles,),
            in_specs=[
                pl.BlockSpec((tm, D), lambda i: (i, 0)),                   # anchor tile
                pl.BlockSpec((D, B), lambda i: (0, 0), **resident_kw),     # E^T, resident
                pl.BlockSpec((1, B), lambda i: (0, 0), **resident_kw),     # sq norms row
                pl.BlockSpec((tm, 1), lambda i: (i, 0)),                   # sq norms of tile
                pl.BlockSpec((1, B), lambda i: (0, 0), **resident_kw),     # labels row
                pl.BlockSpec((tm, 1), lambda i: (i, 0)),                   # labels of tile
            ],
            out_specs=pl.BlockSpec((tm, 1), lambda i: (i, 0)),
        ),
        compiler_params=pltpu.CompilerParams(
            dimension_semantics=("parallel",),      # independent anchor tiles
            vmem_limit_bytes=_vmem_limit_bytes(),
        ),
    )


def batch_hard_triplet_loss(embeddings: jax.Array, labels: jax.Array,
                            margin: float = 5.0, block_m=None, matmul_dtype=None):
    """embeddings: (B, D), labels: (B,) -> scalar f32 BatchHardTripletLoss."""
    B, D = embeddings.shape
    tm = int(block_m) if block_m is not None else _pick_block_m(B)
    assert B % tm == 0, (B, tm)

    # Loop-invariant norms / label layouts, computed once outside the grid loop.
    emb_f32 = embeddings.astype(jnp.float32)
    sq = jnp.sum(emb_f32 * emb_f32, axis=1)
    sq_row = sq.reshape(1, B)
    sq_col = sq.reshape(B, 1)
    lab = labels.astype(jnp.int32)
    lab_row = lab.reshape(1, B)
    lab_col = lab.reshape(B, 1)

    # Optional reduced-precision MXU path (e.g. jnp.bfloat16); default keeps the
    # input dtype so the result matches the f32 PyTorch reference bit-for-tolerance.
    mm_dtype = embeddings.dtype if matmul_dtype is None else matmul_dtype
    a_op = embeddings.astype(mm_dtype)
    et_op = a_op.T  # (D, B): transposed once here, not per grid step in the kernel

    args = (a_op, et_op, sq_row, sq_col, lab_row, lab_col)
    try:
        per_anchor = _build_call(B, D, tm, margin, single_buffer_resident=True)(*args)
    except Exception:
        # Fallback if this Pallas build rejects pipeline_mode=pl.Buffered(1) at the
        # top-level pallas_call; semantics are identical, only VMEM footprint differs.
        per_anchor = _build_call(B, D, tm, margin, single_buffer_resident=False)(*args)

    return jnp.sum(per_anchor) / jnp.float32(B)


def _reference_loss(embeddings, labels, margin=5.0):
    # Pure-JAX mirror of the PyTorch module (eucledian_distance + batch-hard mining).
    e = embeddings.astype(jnp.float32)
    dot = e @ e.T
    sq = jnp.diag(dot)
    dist = sq[None, :] - 2.0 * dot + sq[:, None]
    dist = jnp.maximum(dist, 0.0)
    mask = (dist == 0.0).astype(jnp.float32)
    dist = (1.0 - mask) * jnp.sqrt(dist + mask * 1e-16)
    eye = jnp.eye(labels.shape[0], dtype=bool)
    leq = labels[None, :] == labels[:, None]
    m_ap = (leq & ~eye).astype(jnp.float32)
    hp = jnp.max(m_ap * dist, axis=1, keepdims=True)
    m_an = (~leq).astype(jnp.float32)
    mx = jnp.max(dist, axis=1, keepdims=True)
    hn = jnp.min(dist + mx * (1.0 - m_an), axis=1, keepdims=True)
    return jnp.mean(jnp.maximum(hp - hn + margin, 0.0))


if __name__ == "__main__":
    key = jax.random.PRNGKey(0)

    # Small demo shape (single-tile path).
    B, D = 8, 32
    embeddings = jax.random.normal(key, (B, D), dtype=jnp.float32)
    labels = jnp.array([0, 0, 1, 1, 2, 2, 3, 3], dtype=jnp.int32)

    loss = jax.block_until_ready(batch_hard_triplet_loss(embeddings, labels, margin=5.0))
    ref = jax.block_until_ready(_reference_loss(embeddings, labels, margin=5.0))
    assert jnp.allclose(loss, ref, atol=1e-3, rtol=1e-3), (loss, ref)

    # Multi-tile grid path (4 anchor tiles of 8 rows each) to exercise the tiling.
    k1, _ = jax.random.split(key)
    B2, D2 = 32, 32
    embeddings2 = jax.random.normal(k1, (B2, D2), dtype=jnp.float32)
    labels2 = jnp.arange(B2, dtype=jnp.int32) // 4  # 8 classes, 4 examples each

    loss2 = jax.block_until_ready(
        batch_hard_triplet_loss(embeddings2, labels2, margin=5.0, block_m=8)
    )
    ref2 = jax.block_until_ready(_reference_loss(embeddings2, labels2, margin=5.0))
    assert jnp.allclose(loss2, ref2, atol=1e-3, rtol=1e-3), (loss2, ref2)

    print("KERNEL_OK")
</pallas_src>

<mosaic_0001>
module attributes {stable_mosaic.version = 11 : i64} {
  func.func @_batch_hard_triplet_kernel(%arg0: i32, %arg1: memref<8x32xf32, #tpu.memory_space<vmem>>, %arg2: memref<32x8xf32, #tpu.memory_space<vmem>>, %arg3: memref<1x8xf32, #tpu.memory_space<vmem>>, %arg4: memref<8x1xf32, #tpu.memory_space<vmem>>, %arg5: memref<1x8xi32, #tpu.memory_space<vmem>>, %arg6: memref<8x1xi32, #tpu.memory_space<vmem>>, %arg7: memref<8x1xf32, #tpu.memory_space<vmem>>) attributes {dimension_semantics = [#tpu.dimension_semantics<parallel>], iteration_bounds = array<i64: 1>, scalar_prefetch = 0 : i64, scratch_operands = 0 : i64, tpu.core_type = #tpu.core_type<tc>, window_params = [{transform_indices = @transform_0, window_bounds = array<i64: 8, 32>}, {pipeline_mode = #tpu.pipeline_mode<synchronous>, transform_indices = @transform_1, window_bounds = array<i64: 32, 8>}, {pipeline_mode = #tpu.pipeline_mode<synchronous>, transform_indices = @transform_2, window_bounds = array<i64: 1, 8>}, {transform_indices = @transform_3, window_bounds = array<i64: 8, 1>}, {pipeline_mode = #tpu.pipeline_mode<synchronous>, transform_indices = @transform_4, window_bounds = array<i64: 1, 8>}, {transform_indices = @transform_5, window_bounds = array<i64: 8, 1>}, {transform_indices = @transform_6, window_bounds = array<i64: 8, 1>}]} {
    %c0 = arith.constant 0 : index
    %c0_0 = arith.constant 0 : index
    %0 = vector.load %arg1[%c0, %c0_0] : memref<8x32xf32, #tpu.memory_space<vmem>>, vector<8x32xf32>
    %c0_1 = arith.constant 0 : index
    %c0_2 = arith.constant 0 : index
    %1 = vector.load %arg2[%c0_1, %c0_2] : memref<32x8xf32, #tpu.memory_space<vmem>>, vector<32x8xf32>
    %cst = arith.constant dense<0.000000e+00> : vector<8x8xf32>
    %2 = tpu.matmul %0, %1, %cst {dimension_numbers = #tpu.dot_dimension_numbers<[1], [0], [0], [1], [0, 0, 1, 1], [], []>} : vector<8x32xf32>, vector<32x8xf32>, vector<8x8xf32> -> vector<8x8xf32>
    %c0_3 = arith.constant 0 : index
    %c0_4 = arith.constant 0 : index
    %3 = vector.load %arg3[%c0_3, %c0_4] : memref<1x8xf32, #tpu.memory_space<vmem>>, vector<1x8xf32>
    %cst_5 = arith.constant 2.000000e+00 : f32
    %4 = vector.broadcast %cst_5 : f32 to vector<8x8xf32>
    %5 = arith.mulf %4, %2 : vector<8x8xf32>
    %6 = vector.broadcast %3 : vector<1x8xf32> to vector<8x8xf32>
    %7 = arith.subf %6, %5 : vector<8x8xf32>
    %c0_6 = arith.constant 0 : index
    %c0_7 = arith.constant 0 : index
    %8 = vector.load %arg4[%c0_6, %c0_7] : memref<8x1xf32, #tpu.memory_space<vmem>>, vector<8x1xf32>
    %9 = vector.broadcast %8 : vector<8x1xf32> to vector<8x8xf32>
    %10 = arith.addf %7, %9 : vector<8x8xf32>
    %cst_8 = arith.constant 0.000000e+00 : f32
    %11 = vector.broadcast %cst_8 : f32 to vector<8x8xf32>
    %12 = arith.maximumf %10, %11 : vector<8x8xf32>
    %c0_9 = arith.constant 0 : index
    %c0_10 = arith.constant 0 : index
    %13 = vector.load %arg6[%c0_9, %c0_10] : memref<8x1xi32, #tpu.memory_space<vmem>>, vector<8x1xi32>
    %c0_11 = arith.constant 0 : index
    %c0_12 = arith.constant 0 : index
    %14 = vector.load %arg5[%c0_11, %c0_12] : memref<1x8xi32, #tpu.memory_space<vmem>>, vector<1x8xi32>
    %15 = vector.broadcast %13 : vector<8x1xi32> to vector<8x8xi32>
    %16 = vector.broadcast %14 : vector<1x8xi32> to vector<8x8xi32>
    %17 = arith.cmpi eq, %15, %16 : vector<8x8xi32>
    %18 = tpu.iota {dimensions = array<i32: 0>} : vector<8x8xi32>
    %c8_i32 = arith.constant 8 : i32
    %19 = arith.muli %arg0, %c8_i32 : i32
    %20 = vector.broadcast %19 : i32 to vector<8x8xi32>
    %21 = arith.addi %18, %20 : vector<8x8xi32>
    %22 = tpu.iota {dimensions = array<i32: 1>} : vector<8x8xi32>
    %23 = arith.cmpi ne, %21, %22 : vector<8x8xi32>
    %24 = arith.andi %17, %23 : vector<8x8xi1>
    %cst_13 = arith.constant 0.000000e+00 : f32
    %25 = vector.broadcast %cst_13 : f32 to vector<8x8xf32>
    %26 = arith.select %24, %12, %25 : vector<8x8xi1>, vector<8x8xf32>
    %cst_14 = arith.constant dense<0xFF800000> : vector<8xf32>
    %27 = vector.multi_reduction <maximumf>, %26, %cst_14 [1] : vector<8x8xf32> to vector<8xf32>
    %28 = vector.shape_cast %27 : vector<8xf32> to vector<8x1xf32>
    %cst_15 = arith.constant 3.40282347E+38 : f32
    %29 = vector.broadcast %cst_15 : f32 to vector<8x8xf32>
    %30 = arith.select %17, %29, %12 : vector<8x8xi1>, vector<8x8xf32>
    %cst_16 = arith.constant dense<0x7F800000> : vector<8xf32>
    %31 = vector.multi_reduction <minimumf>, %30, %cst_16 [1] : vector<8x8xf32> to vector<8xf32>
    %32 = vector.shape_cast %31 : vector<8xf32> to vector<8x1xf32>
    %33 = math.sqrt %28 : vector<8x1xf32>
    %34 = math.sqrt %32 : vector<8x1xf32>
    %35 = arith.subf %33, %34 : vector<8x1xf32>
    %cst_17 = arith.constant 5.000000e+00 : f32
    %36 = vector.broadcast %cst_17 : f32 to vector<8x1xf32>
    %37 = arith.addf %35, %36 : vector<8x1xf32>
    %cst_18 = arith.constant 0.000000e+00 : f32
    %38 = vector.broadcast %cst_18 : f32 to vector<8x1xf32>
    %39 = arith.maximumf %37, %38 : vector<8x1xf32>
    %c0_19 = arith.constant 0 : index
    %c0_20 = arith.constant 0 : index
    %40 = vector.load %arg7[%c0_19, %c0_20] : memref<8x1xf32, #tpu.memory_space<vmem>>, vector<8x1xf32>
    tpu.vector_store %arg7[%c0_19, %c0_20], %39 {strides = array<i32>} : memref<8x1xf32, #tpu.memory_space<vmem>>, vector<8x1xf32>,
    return
  }
  func.func @transform_0(%arg0: i32) -> (i32, i32) {
    %c0_i32 = arith.constant 0 : i32
    %c0_i32_0 = arith.constant 0 : i32
    return %arg0, %c0_i32 : i32, i32
  }
  func.func @transform_1(%arg0: i32) -> (i32, i32) {
    %c0_i32 = arith.constant 0 : i32
    %c0_i32_0 = arith.constant 0 : i32
    %c0_i32_1 = arith.constant 0 : i32
    return %c0_i32, %c0_i32_0 : i32, i32
  }
  func.func @transform_2(%arg0: i32) -> (i32, i32) {
    %c0_i32 = arith.constant 0 : i32
    %c0_i32_0 = arith.constant 0 : i32
    %c0_i32_1 = arith.constant 0 : i32
    return %c0_i32, %c0_i32_0 : i32, i32
  }
  func.func @transform_3(%arg0: i32) -> (i32, i32) {
    %c0_i32 = arith.constant 0 : i32
    %c0_i32_0 = arith.constant 0 : i32
    return %arg0, %c0_i32 : i32, i32
  }
  func.func @transform_4(%arg0: i32) -> (i32, i32) {
    %c0_i32 = arith.constant 0 : i32
    %c0_i32_0 = arith.constant 0 : i32
    %c0_i32_1 = arith.constant 0 : i32
    return %c0_i32, %c0_i32_0 : i32, i32
  }
  func.func @transform_5(%arg0: i32) -> (i32, i32) {
    %c0_i32 = arith.constant 0 : i32
    %c0_i32_0 = arith.constant 0 : i32
    return %arg0, %c0_i32 : i32, i32
  }
  func.func @transform_6(%arg0: i32) -> (i32, i32) {
    %c0_i32 = arith.constant 0 : i32
    %c0_i32_0 = arith.constant 0 : i32
    return %arg0, %c0_i32 : i32, i32
  }
}

module attributes {stable_mosaic.version = 11 : i64} {
  func.func @_batch_hard_triplet_kernel(%arg0: i32, %arg1: memref<8x32xf32, #tpu.memory_space<vmem>>, %arg2: memref<32x8xf32, #tpu.memory_space<vmem>>, %arg3: memref<1x8xf32, #tpu.memory_space<vmem>>, %arg4: memref<8x1xf32, #tpu.memory_space<vmem>>, %arg5: memref<1x8xi32, #tpu.memory_space<vmem>>, %arg6: memref<8x1xi32, #tpu.memory_space<vmem>>, %arg7: memref<8x1xf32, #tpu.memory_space<vmem>>) attributes {dimension_semantics = [#tpu.dimension_semantics<parallel>], iteration_bounds = array<i64: 1>, scalar_prefetch = 0 : i64, scratch_operands = 0 : i64, tpu.core_type = #tpu.core_type<tc>, window_params = [{transform_indices = @transform_0, window_bounds = array<i64: 8, 32>}, {pipeline_mode = #tpu.pipeline_mode<synchronous>, transform_indices = @transform_1, window_bounds = array<i64: 32, 8>}, {pipeline_mode = #tpu.pipeline_mode<synchronous>, transform_indices = @transform_2, window_bounds = array<i64: 1, 8>}, {transform_indices = @transform_3, window_bounds = array<i64: 8, 1>}, {pipeline_mode = #tpu.pipeline_mode<synchronous>, transform_indices = @transform_4, window_bounds = array<i64: 1, 8>}, {transform_indices = @transform_5, window_bounds = array<i64: 8, 1>}, {transform_indices = @transform_6, window_bounds = array<i64: 8, 1>}]} {
    %c0 = arith.constant 0 : index
    %c0_0 = arith.constant 0 : index
    %0 = vector.load %arg1[%c0, %c0_0] : memref<8x32xf32, #tpu.memory_space<vmem>>, vector<8x32xf32>
    %c0_1 = arith.constant 0 : index
    %c0_2 = arith.constant 0 : index
    %1 = vector.load %arg2[%c0_1, %c0_2] : memref<32x8xf32, #tpu.memory_space<vmem>>, vector<32x8xf32>
    %cst = arith.constant dense<0.000000e+00> : vector<8x8xf32>
    %2 = tpu.matmul %0, %1, %cst {dimension_numbers = #tpu.dot_dimension_numbers<[1], [0], [0], [1], [0, 0, 1, 1], [], []>} : vector<8x32xf32>, vector<32x8xf32>, vector<8x8xf32> -> vector<8x8xf32>
    %c0_3 = arith.constant 0 : index
    %c0_4 = arith.constant 0 : index
    %3 = vector.load %arg3[%c0_3, %c0_4] : memref<1x8xf32, #tpu.memory_space<vmem>>, vector<1x8xf32>
    %cst_5 = arith.constant 2.000000e+00 : f32
    %4 = vector.broadcast %cst_5 : f32 to vector<8x8xf32>
    %5 = arith.mulf %4, %2 : vector<8x8xf32>
    %6 = vector.broadcast %3 : vector<1x8xf32> to vector<8x8xf32>
    %7 = arith.subf %6, %5 : vector<8x8xf32>
    %c0_6 = arith.constant 0 : index
    %c0_7 = arith.constant 0 : index
    %8 = vector.load %arg4[%c0_6, %c0_7] : memref<8x1xf32, #tpu.memory_space<vmem>>, vector<8x1xf32>
    %9 = vector.broadcast %8 : vector<8x1xf32> to vector<8x8xf32>
    %10 = arith.addf %7, %9 : vector<8x8xf32>
    %cst_8 = arith.constant 0.000000e+00 : f32
    %11 = vector.broadcast %cst_8 : f32 to vector<8x8xf32>
    %12 = arith.maximumf %10, %11 : vector<8x8xf32>
    %c0_9 = arith.constant 0 : index
    %c0_10 = arith.constant 0 : index
    %13 = vector.load %arg6[%c0_9, %c0_10] : memref<8x1xi32, #tpu.memory_space<vmem>>, vector<8x1xi32>
    %c0_11 = arith.constant 0 : index
    %c0_12 = arith.constant 0 : index
    %14 = vector.load %arg5[%c0_11, %c0_12] : memref<1x8xi32, #tpu.memory_space<vmem>>, vector<1x8xi32>
    %15 = vector.broadcast %13 : vector<8x1xi32> to vector<8x8xi32>
    %16 = vector.broadcast %14 : vector<1x8xi32> to vector<8x8xi32>
    %17 = arith.cmpi eq, %15, %16 : vector<8x8xi32>
    %18 = tpu.iota {dimensions = array<i32: 0>} : vector<8x8xi32>
    %c8_i32 = arith.constant 8 : i32
    %19 = arith.muli %arg0, %c8_i32 : i32
    %20 = vector.broadcast %19 : i32 to vector<8x8xi32>
    %21 = arith.addi %18, %20 : vector<8x8xi32>
    %22 = tpu.iota {dimensions = array<i32: 1>} : vector<8x8xi32>
    %23 = arith.cmpi ne, %21, %22 : vector<8x8xi32>
    %24 = arith.andi %17, %23 : vector<8x8xi1>
    %cst_13 = arith.constant 0.000000e+00 : f32
    %25 = vector.broadcast %cst_13 : f32 to vector<8x8xf32>
    %26 = arith.select %24, %12, %25 : vector<8x8xi1>, vector<8x8xf32>
    %cst_14 = arith.constant dense<0xFF800000> : vector<8xf32>
    %27 = vector.multi_reduction <maximumf>, %26, %cst_14 [1] : vector<8x8xf32> to vector<8xf32>
    %28 = vector.shape_cast %27 : vector<8xf32> to vector<8x1xf32>
    %cst_15 = arith.constant 3.40282347E+38 : f32
    %29 = vector.broadcast %cst_15 : f32 to vector<8x8xf32>
    %30 = arith.select %17, %29, %12 : vector<8x8xi1>, vector<8x8xf32>
    %cst_16 = arith.constant dense<0x7F800000> : vector<8xf32>
    %31 = vector.multi_reduction <minimumf>, %30, %cst_16 [1] : vector<8x8xf32> to vector<8xf32>
    %32 = vector.shape_cast %31 : vector<8xf32> to vector<8x1xf32>
    %33 = math.sqrt %28 : vector<8x1xf32>
    %34 = math.sqrt %32 : vector<8x1xf32>
    %35 = arith.subf %33, %34 : vector<8x1xf32>
    %cst_17 = arith.constant 5.000000e+00 : f32
    %36 = vector.broadcast %cst_17 : f32 to vector<8x1xf32>
    %37 = arith.addf %35, %36 : vector<8x1xf32>
    %cst_18 = arith.constant 0.000000e+00 : f32
    %38 = vector.broadcast %cst_18 : f32 to vector<8x1xf32>
    %39 = arith.maximumf %37, %38 : vector<8x1xf32>
    %c0_19 = arith.constant 0 : index
    %c0_20 = arith.constant 0 : index
    %40 = vector.load %arg7[%c0_19, %c0_20] : memref<8x1xf32, #tpu.memory_space<vmem>>, vector<8x1xf32>
    tpu.vector_store %arg7[%c0_19, %c0_20], %39 {strides = array<i32>} : memref<8x1xf32, #tpu.memory_space<vmem>>, vector<8x1xf32>,
    return
  }
  func.func @transform_0(%arg0: i32) -> (i32, i32) {
    %c0_i32 = arith.constant 0 : i32
    %c0_i32_0 = arith.constant 0 : i32
    return %arg0, %c0_i32 : i32, i32
  }
  func.func @transform_1(%arg0: i32) -> (i32, i32) {
    %c0_i32 = arith.constant 0 : i32
    %c0_i32_0 = arith.constant 0 : i32
    %c0_i32_1 = arith.constant 0 : i32
    return %c0_i32, %c0_i32_0 : i32, i32
  }
  func.func @transform_2(%arg0: i32) -> (i32, i32) {
    %c0_i32 = arith.constant 0 : i32
    %c0_i32_0 = arith.constant 0 : i32
    %c0_i32_1 = arith.constant 0 : i32
    return %c0_i32, %c0_i32_0 : i32, i32
  }
  func.func @transform_3(%arg0: i32) -> (i32, i32) {
    %c0_i32 = arith.constant 0 : i32
    %c0_i32_0 = arith.constant 0 : i32
    return %arg0, %c0_i32 : i32, i32
  }
  func.func @transform_4(%arg0: i32) -> (i32, i32) {
    %c0_i32 = arith.constant 0 : i32
    %c0_i32_0 = arith.constant 0 : i32
    %c0_i32_1 = arith.constant 0 : i32
    return %c0_i32, %c0_i32_0 : i32, i32
  }
  func.func @transform_5(%arg0: i32) -> (i32, i32) {
    %c0_i32 = arith.constant 0 : i32
    %c0_i32_0 = arith.constant 0 : i32
    return %arg0, %c0_i32 : i32, i32
  }
  func.func @transform_6(%arg0: i32) -> (i32, i32) {
    %c0_i32 = arith.constant 0 : i32
    %c0_i32_0 = arith.constant 0 : i32
    return %arg0, %c0_i32 : i32, i32
  }
}

</mosaic_0001>

<llo_original>
// kernel: tpu_custom_call.1
$region0: #{tpu_custom_call.1}
  #allocation0 [shape = 'u32[]', space=smem, size = 0x4, offset = 0x4, fixed_abs, tag = 'smem constant byte address 0x4 - core index']
  #allocation1 [shape = 'u32[144,128]{1,0:T(1,128)}', space=vmem, size = 0x12000, scoped, tag = 'internal scratch']
  %s0 = inlined_call_operand.hbm [shape: f32[8,32], index: 0, kind: input, shape index: {}]
  %s1 = inlined_call_operand.hbm [shape: f32[32,8], index: 1, kind: input, shape index: {}]
  %s2 = inlined_call_operand.hbm [shape: f32[1,8], index: 2, kind: input, shape index: {}]
  %s3 = inlined_call_operand.hbm [shape: f32[8,1], index: 3, kind: input, shape index: {}]
  %s4 = inlined_call_operand.hbm [shape: s32[1,8], index: 4, kind: input, shape index: {}]
  %s5 = inlined_call_operand.hbm [shape: s32[8,1], index: 5, kind: input, shape index: {}]
  %s6 = inlined_call_operand.hbm [shape: f32[8,1], index: 6, kind: output, shape index: {}]
  %s7 = sld [smem:[#allocation0]]
  $region58: #{tpu_custom_call.1} parent=0
    _
  %s9 = ssub.s32 1, %s7
  %s10 = scalar_select 0, %s9, %s7
  $region1: #{tpu_custom_call.1} parent=0
    #allocation2 [shape = 'u8[4096]{0}', space=vmem, size = 0x1000, scoped, tag = 'input window, operand 0, single buffered']
    #allocation3 [shape = 's32[1]{0}', space=sflag, size = 0x4, scoped, tag = 'scoped memory for tpu_custom_call.1']
    #allocation4 [shape = 's32[1]{0}', space=sflag, size = 0x4, scoped, tag = 'scoped memory for tpu_custom_call.1']
    #allocation5 [shape = 'u8[16384]{0}', space=vmem, size = 0x4000, scoped, tag = 'input window, operand 1, single buffered']
    #allocation6 [shape = 's32[1]{0}', space=sflag, size = 0x4, scoped, tag = 'scoped memory for tpu_custom_call.1']
    #allocation7 [shape = 'u8[512]{0}', space=vmem, size = 0x400, scoped, tag = 'input window, operand 2, single buffered']
    #allocation8 [shape = 'u8[4096]{0}', space=vmem, size = 0x1000, scoped, tag = 'input window, operand 3, single buffered']
    #allocation9 [shape = 's32[1]{0}', space=sflag, size = 0x4, scoped, tag = 'scoped memory for tpu_custom_call.1']
    #allocation10 [shape = 'u8[512]{0}', space=vmem, size = 0x400, scoped, tag = 'input window, operand 4, single buffered']
    #allocation11 [shape = 'u8[4096]{0}', space=vmem, size = 0x1000, scoped, tag = 'input window, operand 5, single buffered']
    #allocation12 [shape = 's32[1]{0}', space=sflag, size = 0x4, scoped, tag = 'scoped memory for tpu_custom_call.1']
    #allocation13 [shape = 'u8[4096]{0}', space=vmem, size = 0x1000, scoped, tag = 'output window, operand 0, single buffered']
    %11 = vsyncpa [#allocation3], 0
    %12 = vsyncpa [#allocation6], 0
    %13 = vsyncpa [#allocation9], 0
    %14 = vsyncpa [#allocation12], 0
    %15 = vsyncpa [#allocation4], 0
    // Predicated region
    $region2: #{tpu_custom_call.1} parent=1 // pred_check
      _
    $region3: #{tpu_custom_call.1} parent=1 // pred_check_branch
      %17 = sbr.rel (0) target = $region5
    $region4: #{tpu_custom_call.1} parent=1 // pred_region
      %s19 = ssub.s32 128, 128
      %20 = vsyncadd [#allocation3], %s19
      %s22 = sshll.u32 [#allocation2], 4
      %s23 = int_to_ptr.vmem [resolvable:$true] %s22
      %25 = dma.hbm_to_vmem [thread:$0]  %s0, 128, %s23, [#allocation3]
    $region5: #{tpu_custom_call.1} parent=1 // pred_fallthru
      _
    // Predicated region
    $region6: #{tpu_custom_call.1} parent=1 // pred_check
      _
    $region7: #{tpu_custom_call.1} parent=1 // pred_check_branch
      %27 = sbr.rel (0) target = $region9
    $region8: #{tpu_custom_call.1} parent=1 // pred_region
      %s29 = ssub.s32 512, 512
      %30 = vsyncadd [#allocation6], %s29
      %s31 = sshll.u32 [#allocation5], 4
      %s32 = int_to_ptr.vmem [resolvable:$true] %s31
      %37 = dma.hbm_to_vmem [thread:$0]  %s1, 512, %s32, [#allocation6], 128, 128, 8
    $region9: #{tpu_custom_call.1} parent=1 // pred_fallthru
      _
    // Predicated region
    $region10: #{tpu_custom_call.1} parent=1 // pred_check
      _
    $region11: #{tpu_custom_call.1} parent=1 // pred_check_branch
      %39 = sbr.rel (0) target = $region13
    $region12: #{tpu_custom_call.1} parent=1 // pred_region
      %s41 = ssub.s32 16, 16
      %42 = vsyncadd [#allocation6], %s41
      %s44 = sshll.u32 [#allocation7], 4
      %s45 = int_to_ptr.vmem [resolvable:$true] %s44
      %47 = dma.hbm_to_vmem [thread:$0]  %s2, 16, %s45, [#allocation6]
    $region13: #{tpu_custom_call.1} parent=1 // pred_fallthru
      _
    // Predicated region
    $region14: #{tpu_custom_call.1} parent=1 // pred_check
      _
    $region15: #{tpu_custom_call.1} parent=1 // pred_check_branch
      %49 = sbr.rel (0) target = $region17
    $region16: #{tpu_custom_call.1} parent=1 // pred_region
      %s51 = ssub.s32 128, 128
      %52 = vsyncadd [#allocation9], %s51
      %s54 = sshll.u32 [#allocation8], 4
      %s55 = int_to_ptr.vmem [resolvable:$true] %s54
      %57 = dma.hbm_to_vmem [thread:$0]  %s3, 128, %s55, [#allocation9]
    $region17: #{tpu_custom_call.1} parent=1 // pred_fallthru
      _
    // Predicated region
    $region18: #{tpu_custom_call.1} parent=1 // pred_check
      _
    $region19: #{tpu_custom_call.1} parent=1 // pred_check_branch
      %59 = sbr.rel (0) target = $region21
    $region20: #{tpu_custom_call.1} parent=1 // pred_region
      %s61 = ssub.s32 16, 16
      %62 = vsyncadd [#allocation9], %s61
      %s64 = sshll.u32 [#allocation10], 4
      %s65 = int_to_ptr.vmem [resolvable:$true] %s64
      %67 = dma.hbm_to_vmem [thread:$0]  %s4, 16, %s65, [#allocation9]
    $region21: #{tpu_custom_call.1} parent=1 // pred_fallthru
      _
    // Predicated region
    $region22: #{tpu_custom_call.1} parent=1 // pred_check
      _
    $region23: #{tpu_custom_call.1} parent=1 // pred_check_branch
      %69 = sbr.rel (0) target = $region25
    $region24: #{tpu_custom_call.1} parent=1 // pred_region
      %s71 = ssub.s32 128, 128
      %72 = vsyncadd [#allocation12], %s71
      %s74 = sshll.u32 [#allocation11], 4
      %s75 = int_to_ptr.vmem [resolvable:$true] %s74
      %77 = dma.hbm_to_vmem [thread:$0]  %s5, 128, %s75, [#allocation12]
    $region25: #{tpu_custom_call.1} parent=1 // pred_fallthru
      _
    // Predicated region
    $region26: #{tpu_custom_call.1} parent=1 // pred_check
      _
    $region27: #{tpu_custom_call.1} parent=1 // pred_check_branch
      %79 = sbr.rel (0) target = $region29
    $region28: #{tpu_custom_call.1} parent=1 // pred_region
      %80 = dma.done [#allocation3], 128
    $region29: #{tpu_custom_call.1} parent=1 // pred_fallthru
      _
    // Predicated region
    $region30: #{tpu_custom_call.1} parent=1 // pred_check
      _
    $region31: #{tpu_custom_call.1} parent=1 // pred_check_branch
      %82 = sbr.rel (0) target = $region33
    $region32: #{tpu_custom_call.1} parent=1 // pred_region
      %83 = dma.done [#allocation6], 512
    $region33: #{tpu_custom_call.1} parent=1 // pred_fallthru
      _
    // Predicated region
    $region34: #{tpu_custom_call.1} parent=1 // pred_check
      _
    $region35: #{tpu_custom_call.1} parent=1 // pred_check_branch
      %85 = sbr.rel (0) target = $region37
    $region36: #{tpu_custom_call.1} parent=1 // pred_region
      %86 = dma.done [#allocation6], 16
    $region37: #{tpu_custom_call.1} parent=1 // pred_fallthru
      _
    // Predicated region
    $region38: #{tpu_custom_call.1} parent=1 // pred_check
      _
    $region39: #{tpu_custom_call.1} parent=1 // pred_check_branch
      %88 = sbr.rel (0) target = $region41
    $region40: #{tpu_custom_call.1} parent=1 // pred_region
      %89 = dma.done [#allocation9], 128
    $region41: #{tpu_custom_call.1} parent=1 // pred_fallthru
      _
    // Predicated region
    $region42: #{tpu_custom_call.1} parent=1 // pred_check
      _
    $region43: #{tpu_custom_call.1} parent=1 // pred_check_branch
      %91 = sbr.rel (0) target = $region45
    $region44: #{tpu_custom_call.1} parent=1 // pred_region
      %92 = dma.done [#allocation9], 16
    $region45: #{tpu_custom_call.1} parent=1 // pred_fallthru
      _
    // Predicated region
    $region46: #{tpu_custom_call.1} parent=1 // pred_check
      _
    $region47: #{tpu_custom_call.1} parent=1 // pred_check_branch
      %94 = sbr.rel (0) target = $region49
    $region48: #{tpu_custom_call.1} parent=1 // pred_region
      %95 = dma.done [#allocation12], 128
    $region49: #{tpu_custom_call.1} parent=1 // pred_fallthru
      _
    %v96 = vld [vmem:[#allocation2] sm:$0xff]
    %v97 = vld [vmem:[#allocation5] sm:$0xff]
    %v98 = vld [vmem:[#allocation5 + $0x8] sm:$0xff]
    %v99 = vld [vmem:[#allocation5 + $0x10] sm:$0xff]
    %v100 = vld [vmem:[#allocation5 + $0x18] sm:$0xff]
    %vm101 = vcmask 261120
    %v103 = vsel %vm101, %v96, 0
    %105 = vmatprep.subr.mxu0 0.0
    %106 = vmatpush1.msra.mxu0 %v97
    %107 = vmatprep.subr.mxu0 0.0
    %108 = vmatpush1.msra.mxu0 %v98
    %109 = vmatprep.subr.mxu0 0.0
    %110 = vmatpush1.msra.mxu0 %v99
    %111 = vmatprep.subr.mxu0 0.0
    %112 = vmatpush1.msra.mxu0 %v100
    %113 = vmatprep.subr.mxu0 0.0
    %114 = vmatpush1.msra.mxu0 0.0
    %115 = vmatprep.subr.mxu0 0.0
    %116 = vmatpush1.msra.mxu0 0.0
    %117 = vmatprep.subr.mxu0 0.0
    %118 = vmatpush1.msra.mxu0 0.0
    %119 = vmatprep.subr.mxu0 0.0
    %120 = vmatpush1.msra.mxu0 0.0
    %121 = vmatprep.subr.mxu0 0.0
    %122 = vmatpush1.msra.mxu0 0.0
    %123 = vmatprep.subr.mxu0 0.0
    %124 = vmatpush1.msra.mxu0 0.0
    %125 = vmatprep.subr.mxu0 0.0
    %126 = vmatpush1.msra.mxu0 0.0
    %127 = vmatprep.subr.mxu0 0.0
    %128 = vmatpush1.msra.mxu0 0.0
    %129 = vmatprep.subr.mxu0 0.0
    %130 = vmatpush1.msra.mxu0 0.0
    %131 = vmatprep.subr.mxu0 0.0
    %132 = vmatpush1.msra.mxu0 0.0
    %133 = vmatprep.subr.mxu0 0.0
    %134 = vmatpush1.msra.mxu0 0.0
    %135 = vmatprep.subr.mxu0 0.0
    %136 = vmatpush1.msra.mxu0 0.0
    %137 = vmatprep.subr.mxu0 0.0
    %138 = vmatpush1.msra.mxu0 0.0
    %139 = vmatprep.subr.mxu0 0.0
    %140 = vmatpush1.msra.mxu0 0.0
    %141 = vmatprep.subr.mxu0 0.0
    %142 = vmatpush1.msra.mxu0 0.0
    %143 = vmatprep.subr.mxu0 0.0
    %144 = vmatpush1.msra.mxu0 0.0
    %145 = vmatprep.subr.mxu0 0.0
    %146 = vmatpush1.msra.mxu0 0.0
    %147 = vmatprep.subr.mxu0 0.0
    %148 = vmatpush1.msra.mxu0 0.0
    %149 = vmatprep.subr.mxu0 0.0
    %150 = vmatpush1.msra.mxu0 0.0
    %151 = vmatprep.subr.mxu0 0.0
    %152 = vmatpush1.msra.mxu0 0.0
    %153 = vmatprep.subr.mxu0 0.0
    %154 = vmatpush1.msra.mxu0 0.0
    %155 = vmatprep.subr.mxu0 0.0
    %156 = vmatpush1.msra.mxu0 0.0
    %157 = vmatprep.subr.mxu0 0.0
    %158 = vmatpush1.msra.mxu0 0.0
    %159 = vmatprep.subr.mxu0 0.0
    %160 = vmatpush1.msra.mxu0 0.0
    %161 = vmatprep.subr.mxu0 0.0
    %162 = vmatpush1.msra.mxu0 0.0
    %163 = vmatprep.subr.mxu0 0.0
    %164 = vmatpush1.msra.mxu0 0.0
    %165 = vmatprep.subr.mxu0 0.0
    %166 = vmatpush1.msra.mxu0 0.0
    %167 = vmatprep.subr.mxu0 0.0
    %168 = vmatpush1.msra.mxu0 0.0
    %169 = vmatprep.mubr.f32.mxu0 0.0
    %170 = vmatmul.mubr.f32.gmra.mrb[0].mxu0 %v103
    %v171 = vpop.f32.mrb[0].mxu0
    %v172 = vadd.f32 0.0, %v171
    %v173 = vpop.f32.mrb[0].mxu0
    %174 = vdwg.mxu0
    %v175 = vld [vmem:[#allocation7] sm:$0x1]
    %v176 = vmul.f32 %v172, 2.0
    %v178 = vlaneseq
    %v179 = vshrl.u32 %v178, 7
    %v180 = vsub.s32 0, %v179
    %v181 = vrot.slane %v175, %v180
    %v183 = vsub.f32 %v181, %v176
    %v184 = vld [vmem:[#allocation8] sm:$0xff]
    %186 = vset.pattern.permute.xlu0 0
    %187 = vperm.xlu0 %186, %v184
    %v188 = vpop.permute.xlu0 %187
    %v190 = vadd.f32 %v183, %v188
    %v191 = vmax.f32 %v190, 0.0
    %v192 = vld [vmem:[#allocation11] sm:$0xff]
    %v193 = vld [vmem:[#allocation10] sm:$0x1]
    %194 = vset.pattern.permute.xlu0 0
    %195 = vperm.xlu0 %194, %v192
    %v196 = vpop.permute.xlu0 %195
    %v197 = vlaneseq
    %v198 = vshrl.u32 %v197, 7
    %v199 = vsub.s32 0, %v198
    %v200 = vrot.slane %v193, %v199
    %vm201 = vcmp.eq.s32.totalorder %v196, %v200
    %v202 = vlaneseq
    %v203 = vshrl.u32 %v202, 7
    %s204 = smul.u32 0, 8
    %v205 = vstv %s204
    %v206 = vadd.s32 %v203, %v205
    %v207 = vlaneseq
    %v208 = vand.u32 %v207, 127
    %vm209 = vcmp.ne.s32.totalorder %v206, %v208
    %vm210 = vmand %vm201, %vm209
    %v211 = vsel %vm210, %v191, 0.0
    %vm212 = vcmask 64512
    %v213 = vsel %vm212, %v211, -inf
    %214 = vmax.xlane.f32.xlu0 %v213
    %v215 = vpop.xlane.xlu0 %214
    %v216 = vsel %vm201, 3.4028235e+38, %v191
    %v217 = vsel %vm212, %v216, inf
    %218 = vmin.xlane.f32.xlu0 %v217
    %v219 = vpop.xlane.xlu0 %218
    %v220 = vrsqrt.pop %v215
    %v221 = vmul.f32 %v215, %v220
    %vm222 = vcmp.eq.f32.partialorder %v215, inf
    %v223 = vsel %vm222, %v215, %v221
    %vm224 = vcmp.eq.f32.partialorder %v215, 0.0
    %v225 = vand.u32 %v215, 2147483648
    %v226 = vsel %vm224, %v225, %v223
    %v227 = vrsqrt.pop %v219
    %v228 = vmul.f32 %v219, %v227
    %vm229 = vcmp.eq.f32.partialorder %v219, inf
    %v230 = vsel %vm229, %v219, %v228
    %vm231 = vcmp.eq.f32.partialorder %v219, 0.0
    %v232 = vand.u32 %v219, 2147483648
    %v233 = vsel %vm231, %v232, %v230
    %v234 = vsub.f32 %v226, %v233
    %v235 = vadd.f32 %v234, 5.0
    %v236 = vmax.f32 %v235, 0.0
    %vm237 = vcmask 7168
    %238 = vst.msk [vmem:[#allocation13] sm:$0xff] %vm237, %v236
    // Predicated region
    $region50: #{tpu_custom_call.1} parent=1 // pred_check
      _
    $region51: #{tpu_custom_call.1} parent=1 // pred_check_branch
      %240 = sbr.rel (0) target = $region53
    $region52: #{tpu_custom_call.1} parent=1 // pred_region
      %s242 = ssub.s32 128, 128
      %243 = vsyncadd [#allocation4], %s242
      %s245 = sshll.u32 [#allocation13], 4
      %s246 = int_to_ptr.vmem [resolvable:$true] %s245
      %248 = dma.vmem_to_hbm [thread:$0]  %s246, 128, %s6, [#allocation4]
    $region53: #{tpu_custom_call.1} parent=1 // pred_fallthru
      _
    // Predicated region
    $region54: #{tpu_custom_call.1} parent=1 // pred_check
      _
    $region55: #{tpu_custom_call.1} parent=1 // pred_check_branch
      %250 = sbr.rel (0) target = $region57
    $region56: #{tpu_custom_call.1} parent=1 // pred_region
      %251 = dma.done [#allocation4], 128
    $region57: #{tpu_custom_call.1} parent=1 // pred_fallthru
      _
    %252 = vsyncpa [#allocation3], 1
    %253 = vsyncpa [#allocation6], 1
    %254 = vsyncpa [#allocation9], 1
    %255 = vsyncpa [#allocation12], 1
    %256 = vsyncpa [#allocation4], 1

// kernel: tpu_custom_call.1
$region0: #{tpu_custom_call.1}
  #allocation0 [shape = 'u32[]', space=smem, size = 0x4, offset = 0x4, fixed_abs, tag = 'smem constant byte address 0x4 - core index']
  #allocation1 [shape = 'u32[144,128]{1,0:T(1,128)}', space=vmem, size = 0x12000, scoped, tag = 'internal scratch']
  %s0 = inlined_call_operand.hbm [shape: f32[8,32], index: 0, kind: input, shape index: {}]
  %s1 = inlined_call_operand.hbm [shape: f32[32,8], index: 1, kind: input, shape index: {}]
  %s2 = inlined_call_operand.hbm [shape: f32[1,8], index: 2, kind: input, shape index: {}]
  %s3 = inlined_call_operand.hbm [shape: f32[8,1], index: 3, kind: input, shape index: {}]
  %s4 = inlined_call_operand.hbm [shape: s32[1,8], index: 4, kind: input, shape index: {}]
  %s5 = inlined_call_operand.hbm [shape: s32[8,1], index: 5, kind: input, shape index: {}]
  %s6 = inlined_call_operand.hbm [shape: f32[8,1], index: 6, kind: output, shape index: {}]
  %s7 = sld [smem:[#allocation0]]
  $region58: #{tpu_custom_call.1} parent=0
    _
  %s9 = ssub.s32 1, %s7
  %s10 = scalar_select 0, %s9, %s7
  $region1: #{tpu_custom_call.1} parent=0
    #allocation2 [shape = 'u8[4096]{0}', space=vmem, size = 0x1000, scoped, tag = 'input window, operand 0, single buffered']
    #allocation3 [shape = 's32[1]{0}', space=sflag, size = 0x4, scoped, tag = 'scoped memory for tpu_custom_call.1']
    #allocation4 [shape = 's32[1]{0}', space=sflag, size = 0x4, scoped, tag = 'scoped memory for tpu_custom_call.1']
    #allocation5 [shape = 'u8[16384]{0}', space=vmem, size = 0x4000, scoped, tag = 'input window, operand 1, single buffered']
    #allocation6 [shape = 's32[1]{0}', space=sflag, size = 0x4, scoped, tag = 'scoped memory for tpu_custom_call.1']
    #allocation7 [shape = 'u8[512]{0}', space=vmem, size = 0x400, scoped, tag = 'input window, operand 2, single buffered']
    #allocation8 [shape = 'u8[4096]{0}', space=vmem, size = 0x1000, scoped, tag = 'input window, operand 3, single buffered']
    #allocation9 [shape = 's32[1]{0}', space=sflag, size = 0x4, scoped, tag = 'scoped memory for tpu_custom_call.1']
    #allocation10 [shape = 'u8[512]{0}', space=vmem, size = 0x400, scoped, tag = 'input window, operand 4, single buffered']
    #allocation11 [shape = 'u8[4096]{0}', space=vmem, size = 0x1000, scoped, tag = 'input window, operand 5, single buffered']
    #allocation12 [shape = 's32[1]{0}', space=sflag, size = 0x4, scoped, tag = 'scoped memory for tpu_custom_call.1']
    #allocation13 [shape = 'u8[4096]{0}', space=vmem, size = 0x1000, scoped, tag = 'output window, operand 0, single buffered']
    %11 = vsyncpa [#allocation3], 0
    %12 = vsyncpa [#allocation6], 0
    %13 = vsyncpa [#allocation9], 0
    %14 = vsyncpa [#allocation12], 0
    %15 = vsyncpa [#allocation4], 0
    // Predicated region
    $region2: #{tpu_custom_call.1} parent=1 // pred_check
      _
    $region3: #{tpu_custom_call.1} parent=1 // pred_check_branch
      %17 = sbr.rel (0) target = $region5
    $region4: #{tpu_custom_call.1} parent=1 // pred_region
      %s19 = ssub.s32 128, 128
      %20 = vsyncadd [#allocation3], %s19
      %s22 = sshll.u32 [#allocation2], 4
      %s23 = int_to_ptr.vmem [resolvable:$true] %s22
      %25 = dma.hbm_to_vmem [thread:$0]  %s0, 128, %s23, [#allocation3]
    $region5: #{tpu_custom_call.1} parent=1 // pred_fallthru
      _
    // Predicated region
    $region6: #{tpu_custom_call.1} parent=1 // pred_check
      _
    $region7: #{tpu_custom_call.1} parent=1 // pred_check_branch
      %27 = sbr.rel (0) target = $region9
    $region8: #{tpu_custom_call.1} parent=1 // pred_region
      %s29 = ssub.s32 512, 512
      %30 = vsyncadd [#allocation6], %s29
      %s31 = sshll.u32 [#allocation5], 4
      %s32 = int_to_ptr.vmem [resolvable:$true] %s31
      %37 = dma.hbm_to_vmem [thread:$0]  %s1, 512, %s32, [#allocation6], 128, 128, 8
    $region9: #{tpu_custom_call.1} parent=1 // pred_fallthru
      _
    // Predicated region
    $region10: #{tpu_custom_call.1} parent=1 // pred_check
      _
    $region11: #{tpu_custom_call.1} parent=1 // pred_check_branch
      %39 = sbr.rel (0) target = $region13
    $region12: #{tpu_custom_call.1} parent=1 // pred_region
      %s41 = ssub.s32 16, 16
      %42 = vsyncadd [#allocation6], %s41
      %s44 = sshll.u32 [#allocation7], 4
      %s45 = int_to_ptr.vmem [resolvable:$true] %s44
      %47 = dma.hbm_to_vmem [thread:$0]  %s2, 16, %s45, [#allocation6]
    $region13: #{tpu_custom_call.1} parent=1 // pred_fallthru
      _
    // Predicated region
    $region14: #{tpu_custom_call.1} parent=1 // pred_check
      _
    $region15: #{tpu_custom_call.1} parent=1 // pred_check_branch
      %49 = sbr.rel (0) target = $region17
    $region16: #{tpu_custom_call.1} parent=1 // pred_region
      %s51 = ssub.s32 128, 128
      %52 = vsyncadd [#allocation9], %s51
      %s54 = sshll.u32 [#allocation8], 4
      %s55 = int_to_ptr.vmem [resolvable:$true] %s54
      %57 = dma.hbm_to_vmem [thread:$0]  %s3, 128, %s55, [#allocation9]
    $region17: #{tpu_custom_call.1} parent=1 // pred_fallthru
      _
    // Predicated region
    $region18: #{tpu_custom_call.1} parent=1 // pred_check
      _
    $region19: #{tpu_custom_call.1} parent=1 // pred_check_branch
      %59 = sbr.rel (0) target = $region21
    $region20: #{tpu_custom_call.1} parent=1 // pred_region
      %s61 = ssub.s32 16, 16
      %62 = vsyncadd [#allocation9], %s61
      %s64 = sshll.u32 [#allocation10], 4
      %s65 = int_to_ptr.vmem [resolvable:$true] %s64
      %67 = dma.hbm_to_vmem [thread:$0]  %s4, 16, %s65, [#allocation9]
    $region21: #{tpu_custom_call.1} parent=1 // pred_fallthru
      _
    // Predicated region
    $region22: #{tpu_custom_call.1} parent=1 // pred_check
      _
    $region23: #{tpu_custom_call.1} parent=1 // pred_check_branch
      %69 = sbr.rel (0) target = $region25
    $region24: #{tpu_custom_call.1} parent=1 // pred_region
      %s71 = ssub.s32 128, 128
      %72 = vsyncadd [#allocation12], %s71
      %s74 = sshll.u32 [#allocation11], 4
      %s75 = int_to_ptr.vmem [resolvable:$true] %s74
      %77 = dma.hbm_to_vmem [thread:$0]  %s5, 128, %s75, [#allocation12]
    $region25: #{tpu_custom_call.1} parent=1 // pred_fallthru
      _
    // Predicated region
    $region26: #{tpu_custom_call.1} parent=1 // pred_check
      _
    $region27: #{tpu_custom_call.1} parent=1 // pred_check_branch
      %79 = sbr.rel (0) target = $region29
    $region28: #{tpu_custom_call.1} parent=1 // pred_region
      %80 = dma.done [#allocation3], 128
    $region29: #{tpu_custom_call.1} parent=1 // pred_fallthru
      _
    // Predicated region
    $region30: #{tpu_custom_call.1} parent=1 // pred_check
      _
    $region31: #{tpu_custom_call.1} parent=1 // pred_check_branch
      %82 = sbr.rel (0) target = $region33
    $region32: #{tpu_custom_call.1} parent=1 // pred_region
      %83 = dma.done [#allocation6], 512
    $region33: #{tpu_custom_call.1} parent=1 // pred_fallthru
      _
    // Predicated region
    $region34: #{tpu_custom_call.1} parent=1 // pred_check
      _
    $region35: #{tpu_custom_call.1} parent=1 // pred_check_branch
      %85 = sbr.rel (0) target = $region37
    $region36: #{tpu_custom_call.1} parent=1 // pred_region
      %86 = dma.done [#allocation6], 16
    $region37: #{tpu_custom_call.1} parent=1 // pred_fallthru
      _
    // Predicated region
    $region38: #{tpu_custom_call.1} parent=1 // pred_check
      _
    $region39: #{tpu_custom_call.1} parent=1 // pred_check_branch
      %88 = sbr.rel (0) target = $region41
    $region40: #{tpu_custom_call.1} parent=1 // pred_region
      %89 = dma.done [#allocation9], 128
    $region41: #{tpu_custom_call.1} parent=1 // pred_fallthru
      _
    // Predicated region
    $region42: #{tpu_custom_call.1} parent=1 // pred_check
      _
    $region43: #{tpu_custom_call.1} parent=1 // pred_check_branch
      %91 = sbr.rel (0) target = $region45
    $region44: #{tpu_custom_call.1} parent=1 // pred_region
      %92 = dma.done [#allocation9], 16
    $region45: #{tpu_custom_call.1} parent=1 // pred_fallthru
      _
    // Predicated region
    $region46: #{tpu_custom_call.1} parent=1 // pred_check
      _
    $region47: #{tpu_custom_call.1} parent=1 // pred_check_branch
      %94 = sbr.rel (0) target = $region49
    $region48: #{tpu_custom_call.1} parent=1 // pred_region
      %95 = dma.done [#allocation12], 128
    $region49: #{tpu_custom_call.1} parent=1 // pred_fallthru
      _
    %v96 = vld [vmem:[#allocation2] sm:$0xff]
    %v97 = vld [vmem:[#allocation5] sm:$0xff]
    %v98 = vld [vmem:[#allocation5 + $0x8] sm:$0xff]
    %v99 = vld [vmem:[#allocation5 + $0x10] sm:$0xff]
    %v100 = vld [vmem:[#allocation5 + $0x18] sm:$0xff]
    %vm101 = vcmask 261120
    %v103 = vsel %vm101, %v96, 0
    %105 = vmatprep.subr.mxu0 0.0
    %106 = vmatpush1.msra.mxu0 %v97
    %107 = vmatprep.subr.mxu0 0.0
    %108 = vmatpush1.msra.mxu0 %v98
    %109 = vmatprep.subr.mxu0 0.0
    %110 = vmatpush1.msra.mxu0 %v99
    %111 = vmatprep.subr.mxu0 0.0
    %112 = vmatpush1.msra.mxu0 %v100
    %113 = vmatprep.subr.mxu0 0.0
    %114 = vmatpush1.msra.mxu0 0.0
    %115 = vmatprep.subr.mxu0 0.0
    %116 = vmatpush1.msra.mxu0 0.0
    %117 = vmatprep.subr.mxu0 0.0
    %118 = vmatpush1.msra.mxu0 0.0
    %119 = vmatprep.subr.mxu0 0.0
    %120 = vmatpush1.msra.mxu0 0.0
    %121 = vmatprep.subr.mxu0 0.0
    %122 = vmatpush1.msra.mxu0 0.0
    %123 = vmatprep.subr.mxu0 0.0
    %124 = vmatpush1.msra.mxu0 0.0
    %125 = vmatprep.subr.mxu0 0.0
    %126 = vmatpush1.msra.mxu0 0.0
    %127 = vmatprep.subr.mxu0 0.0
    %128 = vmatpush1.msra.mxu0 0.0
    %129 = vmatprep.subr.mxu0 0.0
    %130 = vmatpush1.msra.mxu0 0.0
    %131 = vmatprep.subr.mxu0 0.0
    %132 = vmatpush1.msra.mxu0 0.0
    %133 = vmatprep.subr.mxu0 0.0
    %134 = vmatpush1.msra.mxu0 0.0
    %135 = vmatprep.subr.mxu0 0.0
    %136 = vmatpush1.msra.mxu0 0.0
    %137 = vmatprep.subr.mxu0 0.0
    %138 = vmatpush1.msra.mxu0 0.0
    %139 = vmatprep.subr.mxu0 0.0
    %140 = vmatpush1.msra.mxu0 0.0
    %141 = vmatprep.subr.mxu0 0.0
    %142 = vmatpush1.msra.mxu0 0.0
    %143 = vmatprep.subr.mxu0 0.0
    %144 = vmatpush1.msra.mxu0 0.0
    %145 = vmatprep.subr.mxu0 0.0
    %146 = vmatpush1.msra.mxu0 0.0
    %147 = vmatprep.subr.mxu0 0.0
    %148 = vmatpush1.msra.mxu0 0.0
    %149 = vmatprep.subr.mxu0 0.0
    %150 = vmatpush1.msra.mxu0 0.0
    %151 = vmatprep.subr.mxu0 0.0
    %152 = vmatpush1.msra.mxu0 0.0
    %153 = vmatprep.subr.mxu0 0.0
    %154 = vmatpush1.msra.mxu0 0.0
    %155 = vmatprep.subr.mxu0 0.0
    %156 = vmatpush1.msra.mxu0 0.0
    %157 = vmatprep.subr.mxu0 0.0
    %158 = vmatpush1.msra.mxu0 0.0
    %159 = vmatprep.subr.mxu0 0.0
    %160 = vmatpush1.msra.mxu0 0.0
    %161 = vmatprep.subr.mxu0 0.0
    %162 = vmatpush1.msra.mxu0 0.0
    %163 = vmatprep.subr.mxu0 0.0
    %164 = vmatpush1.msra.mxu0 0.0
    %165 = vmatprep.subr.mxu0 0.0
    %166 = vmatpush1.msra.mxu0 0.0
    %167 = vmatprep.subr.mxu0 0.0
    %168 = vmatpush1.msra.mxu0 0.0
    %169 = vmatprep.mubr.f32.mxu0 0.0
    %170 = vmatmul.mubr.f32.gmra.mrb[0].mxu0 %v103
    %v171 = vpop.f32.mrb[0].mxu0
    %v172 = vadd.f32 0.0, %v171
    %v173 = vpop.f32.mrb[0].mxu0
    %174 = vdwg.mxu0
    %v175 = vld [vmem:[#allocation7] sm:$0x1]
    %v176 = vmul.f32 %v172, 2.0
    %v178 = vlaneseq
    %v179 = vshrl.u32 %v178, 7
    %v180 = vsub.s32 0, %v179
    %v181 = vrot.slane %v175, %v180
    %v183 = vsub.f32 %v181, %v176
    %v184 = vld [vmem:[#allocation8] sm:$0xff]
    %186 = vset.pattern.permute.xlu0 0
    %187 = vperm.xlu0 %186, %v184
    %v188 = vpop.permute.xlu0 %187
    %v190 = vadd.f32 %v183, %v188
    %v191 = vmax.f32 %v190, 0.0
    %v192 = vld [vmem:[#allocation11] sm:$0xff]
    %v193 = vld [vmem:[#allocation10] sm:$0x1]
    %194 = vset.pattern.permute.xlu0 0
    %195 = vperm.xlu0 %194, %v192
    %v196 = vpop.permute.xlu0 %195
    %v197 = vlaneseq
    %v198 = vshrl.u32 %v197, 7
    %v199 = vsub.s32 0, %v198
    %v200 = vrot.slane %v193, %v199
    %vm201 = vcmp.eq.s32.totalorder %v196, %v200
    %v202 = vlaneseq
    %v203 = vshrl.u32 %v202, 7
    %s204 = smul.u32 0, 8
    %v205 = vstv %s204
    %v206 = vadd.s32 %v203, %v205
    %v207 = vlaneseq
    %v208 = vand.u32 %v207, 127
    %vm209 = vcmp.ne.s32.totalorder %v206, %v208
    %vm210 = vmand %vm201, %vm209
    %v211 = vsel %vm210, %v191, 0.0
    %vm212 = vcmask 64512
    %v213 = vsel %vm212, %v211, -inf
    %214 = vmax.xlane.f32.xlu0 %v213
    %v215 = vpop.xlane.xlu0 %214
    %v216 = vsel %vm201, 3.4028235e+38, %v191
    %v217 = vsel %vm212, %v216, inf
    %218 = vmin.xlane.f32.xlu0 %v217
    %v219 = vpop.xlane.xlu0 %218
    %v220 = vrsqrt.pop %v215
    %v221 = vmul.f32 %v215, %v220
    %vm222 = vcmp.eq.f32.partialorder %v215, inf
    %v223 = vsel %vm222, %v215, %v221
    %vm224 = vcmp.eq.f32.partialorder %v215, 0.0
    %v225 = vand.u32 %v215, 2147483648
    %v226 = vsel %vm224, %v225, %v223
    %v227 = vrsqrt.pop %v219
    %v228 = vmul.f32 %v219, %v227
    %vm229 = vcmp.eq.f32.partialorder %v219, inf
    %v230 = vsel %vm229, %v219, %v228
    %vm231 = vcmp.eq.f32.partialorder %v219, 0.0
    %v232 = vand.u32 %v219, 2147483648
    %v233 = vsel %vm231, %v232, %v230
    %v234 = vsub.f32 %v226, %v233
    %v235 = vadd.f32 %v234, 5.0
    %v236 = vmax.f32 %v235, 0.0
    %vm237 = vcmask 7168
    %238 = vst.msk [vmem:[#allocation13] sm:$0xff] %vm237, %v236
    // Predicated region
    $region50: #{tpu_custom_call.1} parent=1 // pred_check
      _
    $region51: #{tpu_custom_call.1} parent=1 // pred_check_branch
      %240 = sbr.rel (0) target = $region53
    $region52: #{tpu_custom_call.1} parent=1 // pred_region
      %s242 = ssub.s32 128, 128
      %243 = vsyncadd [#allocation4], %s242
      %s245 = sshll.u32 [#allocation13], 4
      %s246 = int_to_ptr.vmem [resolvable:$true] %s245
      %248 = dma.vmem_to_hbm [thread:$0]  %s246, 128, %s6, [#allocation4]
    $region53: #{tpu_custom_call.1} parent=1 // pred_fallthru
      _
    // Predicated region
    $region54: #{tpu_custom_call.1} parent=1 // pred_check
      _
    $region55: #{tpu_custom_call.1} parent=1 // pred_check_branch
      %250 = sbr.rel (0) target = $region57
    $region56: #{tpu_custom_call.1} parent=1 // pred_region
      %251 = dma.done [#allocation4], 128
    $region57: #{tpu_custom_call.1} parent=1 // pred_fallthru
      _
    %252 = vsyncpa [#allocation3], 1
    %253 = vsyncpa [#allocation6], 1
    %254 = vsyncpa [#allocation9], 1
    %255 = vsyncpa [#allocation12], 1
    %256 = vsyncpa [#allocation4], 1

</llo_original>
